<compile_context>
chip_gen: v7x
topology: tpu7x:2x2x1
jax: 0.10.0
libtpu: 0.0.40
codegen_flags: <defaults>
</compile_context>

<pallas_src>
import jax
import jax.numpy as jnp
from jax.experimental import pallas as pl
from jax.experimental.pallas import tpu as pltpu


def _score_split_kernel(score_ref, out_ref):
    # score_ref: (rows, TB) where rows = 1 + neg_rate.
    # out_ref:   (2, TB)   row 0 = positive score, row 1 = mean negative score.
    s = score_ref[...].astype(jnp.float32)               # f32 accumulate
    neg_rate = s.shape[0] - 1                            # static
    total = jnp.sum(s, axis=0, keepdims=True)            # aligned cross-sublane reduce (XLU)
    pos = s[0:1, :]                                      # row 0, sublane-aligned
    neg = (total - pos) * (1.0 / neg_rate)               # sum-minus-row0: no misaligned slice
    out_ref[...] = jnp.concatenate([pos, neg], axis=0).astype(out_ref.dtype)


def _pick_lane_tile(batch_size: int, rows: int, itemsize: int) -> int:
    """Largest lane tile that is a multiple of 128, divides B, <= 2048 lanes, and
    keeps (rows x TB x itemsize) x 2 double-buffers well under v7x scoped VMEM."""
    if batch_size % 128 != 0:
        # Full-extent block is always legal; stores become masked (perf cliff, not a bug).
        return batch_size
    vmem_budget = 8 * 1024 * 1024                        # per-input block budget (x2 buffers fits easily)
    max_tb_mem = max(128, (vmem_budget // (rows * itemsize * 2)) // 128 * 128)
    tb = min(batch_size, 2048, max_tb_mem)
    while batch_size % tb != 0:
        tb -= 128
    return max(tb, 128)


def convkb_scores(score_flat: jax.Array, batch_size: int, lane_tile: int | None = None):
    """score_flat: (batch_seq_size,) = ((1 + neg_rate) * batch_size,).

    Returns (positive_score, negative_score), each of shape (batch_size,),
    matching Model.get_positive_score / Model.get_negative_score.
    """
    total = score_flat.shape[0]
    assert total % batch_size == 0, "batch_seq_size must be a multiple of batch_size"
    rows = total // batch_size                           # 1 + neg_rate
    assert rows >= 2, "need neg_rate >= 1 (torch.mean over an empty slice is NaN)"

    score_2d = score_flat.reshape(rows, batch_size)      # row-major, matches torch .view

    tb = lane_tile if lane_tile is not None else _pick_lane_tile(
        batch_size, rows, jnp.dtype(score_flat.dtype).itemsize)
    assert batch_size % tb == 0, "lane_tile must divide batch_size"

    out = pl.pallas_call(
        _score_split_kernel,
        out_shape=jax.ShapeDtypeStruct((2, batch_size), score_flat.dtype),
        grid=(batch_size // tb,),
        in_specs=[pl.BlockSpec((rows, tb), lambda i: (0, i))],
        out_specs=pl.BlockSpec((2, tb), lambda i: (0, i)),
        compiler_params=pltpu.CompilerParams(
            dimension_semantics=("parallel",)),          # lane tiles are independent (v7x: 2 TCs)
    )(score_2d)

    return out[0], out[1]


def _reference(score_flat, batch_size):
    pos = score_flat[:batch_size].astype(jnp.float32)
    neg = jnp.mean(
        score_flat[batch_size:].astype(jnp.float32).reshape(-1, batch_size), axis=0)
    return pos, neg


if __name__ == "__main__":
    key = jax.random.PRNGKey(0)

    # --- small f32 case, exercising the multi-block (tiled, grid > 1) path ---
    batch_size = 512
    neg_rate = 8
    batch_seq_size = batch_size * (1 + neg_rate)
    score = jax.random.normal(key, (batch_seq_size,), dtype=jnp.float32)

    pos, neg = convkb_scores(score, batch_size, lane_tile=256)   # grid = (2,)
    pos = jax.block_until_ready(pos)
    neg = jax.block_until_ready(neg)

    ref_pos, ref_neg = _reference(score, batch_size)
    assert pos.shape == (batch_size,) and neg.shape == (batch_size,)
    assert jnp.allclose(pos, ref_pos, atol=1e-6), "positive score mismatch (f32)"
    assert jnp.allclose(neg, ref_neg, atol=1e-5), "negative score mismatch (f32)"

    # --- bf16 I/O path (f32 accumulation inside the kernel), auto lane tile ---
    score_bf16 = score.astype(jnp.bfloat16)
    pos_b, neg_b = convkb_scores(score_bf16, batch_size)
    pos_b = jax.block_until_ready(pos_b)
    neg_b = jax.block_until_ready(neg_b)

    ref_pos_b, ref_neg_b = _reference(score_bf16, batch_size)
    assert pos_b.dtype == jnp.bfloat16 and neg_b.dtype == jnp.bfloat16
    assert jnp.allclose(pos_b.astype(jnp.float32), ref_pos_b, atol=2e-2, rtol=2e-2)
    assert jnp.allclose(neg_b.astype(jnp.float32), ref_neg_b, atol=2e-2, rtol=2e-2)

    print("KERNEL_OK")
</pallas_src>

<mosaic_0001>
module attributes {stable_mosaic.version = 11 : i64} {
  func.func @_score_split_kernel(%arg0: i32, %arg1: memref<9x256xf32, #tpu.memory_space<vmem>>, %arg2: memref<2x256xf32, #tpu.memory_space<vmem>>) attributes {dimension_semantics = [#tpu.dimension_semantics<parallel>], iteration_bounds = array<i64: 2>, scalar_prefetch = 0 : i64, scratch_operands = 0 : i64, tpu.core_type = #tpu.core_type<tc>, window_params = [{transform_indices = @transform_0, window_bounds = array<i64: 9, 256>}, {transform_indices = @transform_1, window_bounds = array<i64: 2, 256>}]} {
    %c0 = arith.constant 0 : index
    %c0_0 = arith.constant 0 : index
    %0 = vector.load %arg1[%c0, %c0_0] : memref<9x256xf32, #tpu.memory_space<vmem>>, vector<9x256xf32>
    %cst = arith.constant dense<0.000000e+00> : vector<256xf32>
    %1 = vector.multi_reduction <add>, %0, %cst [0] : vector<9x256xf32> to vector<256xf32>
    %2 = vector.shape_cast %1 : vector<256xf32> to vector<1x256xf32>
    %3 = vector.extract_strided_slice %0 {offsets = [0, 0], sizes = [1, 256], strides = [1, 1]} : vector<9x256xf32> to vector<1x256xf32>
    %4 = arith.subf %2, %3 : vector<1x256xf32>
    %cst_1 = arith.constant 1.250000e-01 : f32
    %5 = vector.broadcast %cst_1 : f32 to vector<1x256xf32>
    %6 = arith.mulf %4, %5 : vector<1x256xf32>
    %7 = tpu.concatenate %3, %6 in 0 : vector<1x256xf32>, vector<1x256xf32> -> vector<2x256xf32>
    %c0_2 = arith.constant 0 : index
    %c0_3 = arith.constant 0 : index
    %8 = vector.load %arg2[%c0_2, %c0_3] : memref<2x256xf32, #tpu.memory_space<vmem>>, vector<2x256xf32>
    tpu.vector_store %arg2[%c0_2, %c0_3], %7 {strides = array<i32>} : memref<2x256xf32, #tpu.memory_space<vmem>>, vector<2x256xf32>,
    return
  }
  func.func @transform_0(%arg0: i32) -> (i32, i32) {
    %c0_i32 = arith.constant 0 : i32
    %c0_i32_0 = arith.constant 0 : i32
    return %c0_i32, %arg0 : i32, i32
  }
  func.func @transform_1(%arg0: i32) -> (i32, i32) {
    %c0_i32 = arith.constant 0 : i32
    %c0_i32_0 = arith.constant 0 : i32
    return %c0_i32, %arg0 : i32, i32
  }
}

</mosaic_0001>

<llo_original>
// kernel: tpu_custom_call.1
$region0: #{tpu_custom_call.1}
  #allocation0 [shape = 'u32[]', space=smem, size = 0x4, offset = 0x4, fixed_abs, tag = 'smem constant byte address 0x4 - core index']
  #allocation1 [shape = 'u32[144,128]{1,0:T(1,128)}', space=vmem, size = 0x12000, scoped, tag = 'internal scratch']
  %s0 = inlined_call_operand.hbm [shape: f32[9,512], index: 0, kind: input, shape index: {}]
  %s1 = inlined_call_operand.hbm [shape: f32[2,512], index: 1, kind: output, shape index: {}]
  %s2 = sld [smem:[#allocation0]]
  $region41: #{tpu_custom_call.1} parent=0
    _
  %s4 = ssub.s32 1, %s2
  %s5 = scalar_select 0, %s4, %s2
  $region1: #{tpu_custom_call.1} parent=0
    #allocation2 [shape = 'u8[32768]{0}', space=vmem, size = 0x8000, scoped, tag = 'input window, operand 0']
    #allocation3 [shape = 's32[2]{0}', space=sflag, size = 0x8, scoped, tag = 'scoped memory for tpu_custom_call.1']
    #allocation4 [shape = 's32[2]{0}', space=sflag, size = 0x8, scoped, tag = 'scoped memory for tpu_custom_call.1']
    #allocation5 [shape = 'u8[4096]{0}', space=vmem, size = 0x1000, scoped, tag = 'output window, operand 0']
    %6 = vsyncpa [#allocation3], 0
    %s7 = scalar_lea.sflag [#allocation3], 1
    %8 = vsyncpa %s7, 0
    %9 = vsyncpa [#allocation4], 0
    %s10 = scalar_lea.sflag [#allocation4], 1
    %11 = vsyncpa %s10, 0
    loop: start=0, step=1, limit=4
    $region2: #{tpu_custom_call.1} parent=1 // loop_pre_header
      _
    $region3: #{tpu_custom_call.1} parent=1 // loop_header
      %s13 = sphi 0, %s17
      %p14 = scmp.ge.s32.totalorder %s13, 4
      %s23 = sphi 0, %s25
      %s26 = sphi 0, %s23
      %s27 = sphi 0, %s26
      %s43 = sphi 0, %s27
      %s49 = sphi 0, %s51
      %s52 = sphi 0, %s49
      %s53 = sphi 0, %s52
      %s69 = sphi 0, %s53
    $region4: #{tpu_custom_call.1} parent=1 // loop_header_branch
      %16 = sbr.rel (%p14) target = $region8
    $region5: #{tpu_custom_call.1} parent=1 // loop_body
      %s18 = ssub.s32 %s13, 1
      %s19 = ssub.s32 %s13, 2
      %s20 = sadd.s32 %s13, 1
      %s21 = ssub.s32 %s13, %s20
      %p22 = scmp.eq.s32.totalorder %s21, 0
      %s24 = sadd.s32 %s23, 1
      %s25 = scalar_select %p22, %s23, %s24
      %p28 = pneg %p22
      %p29 = scmp.eq.s32.totalorder %s13, 1
      %p30 = por %p28, %p29
      %p31 = scmp.ne.s32.totalorder %s23, %s26
      %p32 = scmp.eq.s32.totalorder %s13, 0
      %p33 = por %p31, %p32
      %p34 = scmp.ne.s32.totalorder %s23, %s26
      %p35 = scmp.eq.s32.totalorder %s18, 1
      %p36 = por %p34, %p35
      %p37 = scmp.ne.s32.totalorder %s26, %s27
      %p38 = scmp.eq.s32.totalorder %s18, 0
      %p39 = por %p37, %p38
      %p40 = scmp.ne.s32.totalorder %s26, %s27
      %p41 = scmp.eq.s32.totalorder %s19, 1
      %p42 = por %p40, %p41
      %p44 = scmp.ne.s32.totalorder %s27, %s43
      %p45 = scmp.eq.s32.totalorder %s19, 0
      %p46 = por %p44, %p45
      %s47 = ssub.s32 %s13, %s20
      %p48 = scmp.eq.s32.totalorder %s47, 0
      %s50 = sadd.s32 %s49, 1
      %s51 = scalar_select %p48, %s49, %s50
      %p54 = pneg %p48
      %p55 = scmp.eq.s32.totalorder %s13, 1
      %p56 = por %p54, %p55
      %p57 = scmp.ne.s32.totalorder %s49, %s52
      %p58 = scmp.eq.s32.totalorder %s13, 0
      %p59 = por %p57, %p58
      %p60 = scmp.ne.s32.totalorder %s49, %s52
      %p61 = scmp.eq.s32.totalorder %s18, 1
      %p62 = por %p60, %p61
      %p63 = scmp.ne.s32.totalorder %s52, %s53
      %p64 = scmp.eq.s32.totalorder %s18, 0
      %p65 = por %p63, %p64
      %p66 = scmp.ne.s32.totalorder %s52, %s53
      %p67 = scmp.eq.s32.totalorder %s19, 1
      %p68 = por %p66, %p67
      %p70 = scmp.ne.s32.totalorder %s53, %s69
      %p71 = scmp.eq.s32.totalorder %s19, 0
      %p72 = por %p70, %p71
      %p73 = scmp.le.s32.totalorder 1, %s13
      %p74 = scmp.lt.s32.totalorder %s13, 3
      %p75 = pnand %p73, %p74
      %p76 = pneg %p75
      // Predicated region
      $region9: #{tpu_custom_call.1} parent=5 // pred_check
        _
      $region10: #{tpu_custom_call.1} parent=5 // pred_check_branch
        %78 = sbr.rel (%p75) target = $region12
      $region11: #{tpu_custom_call.1} parent=5 // pred_region
        %s79 = ssub.s32 %s13, 1
      $region12: #{tpu_custom_call.1} parent=5 // pred_fallthru
        _
      %p80 = scmp.lt.s32.totalorder %s13, 2
      // Predicated region
      $region13: #{tpu_custom_call.1} parent=5 // pred_check
        %p81 = pneg %p80
      $region14: #{tpu_custom_call.1} parent=5 // pred_check_branch
        %83 = sbr.rel (%p81) target = $region16
      $region15: #{tpu_custom_call.1} parent=5 // pred_region
        // Predicated region
        $region17: #{tpu_custom_call.1} parent=15 // pred_check
          %p84 = pneg %p33
        $region18: #{tpu_custom_call.1} parent=15 // pred_check_branch
          %86 = sbr.rel (%p84) target = $region20
        $region19: #{tpu_custom_call.1} parent=15 // pred_region
          %s87 = sand.u32 %s23, 1
          %s88 = scalar_lea.sflag [#allocation3], %s87
          %s89 = sand.u32 %s23, 1
          %s90 = smul.addr %s89, 32
          %s91 = scalar_lea.vmem [#allocation2], %s90
          %s92 = smul.u32 2, %s13
          %s94 = ssub.s32 512, 512
          %95 = vsyncadd %s88, %s94
          %s96 = smul.addr %s92, 128
          %s97 = scalar_lea.hbm %s0, %s96
          %s98 = sshll.u32 %s91, 4
          %s99 = int_to_ptr.vmem [resolvable:$true] %s98
          %104 = dma.hbm_to_vmem [thread:$0]  %s97, 512, %s99, %s88, 512, 256, 16
        $region20: #{tpu_custom_call.1} parent=15 // pred_fallthru
          _
      $region16: #{tpu_custom_call.1} parent=5 // pred_fallthru
        _
      %p105 = scmp.le.s32.totalorder 1, %s13
      %p106 = scmp.lt.s32.totalorder %s13, 3
      %p107 = pnand %p105, %p106
      %p108 = pneg %p107
      // Predicated region
      $region21: #{tpu_custom_call.1} parent=5 // pred_check
        _
      $region22: #{tpu_custom_call.1} parent=5 // pred_check_branch
        %110 = sbr.rel (%p107) target = $region24
      $region23: #{tpu_custom_call.1} parent=5 // pred_region
        %s111 = ssub.s32 %s13, 1
        %s112 = sand.u32 %s26, 1
        %s113 = scalar_lea.sflag [#allocation3], %s112
        %s114 = sand.u32 %s26, 1
        %s115 = smul.addr %s114, 32
        %s116 = scalar_lea.vmem [#allocation2], %s115
        // Predicated region
        $region25: #{tpu_custom_call.1} parent=23 // pred_check
          %p117 = pneg %p39
        $region26: #{tpu_custom_call.1} parent=23 // pred_check_branch
          %119 = sbr.rel (%p117) target = $region28
        $region27: #{tpu_custom_call.1} parent=23 // pred_region
          %120 = dma.done %s113, 512
        $region28: #{tpu_custom_call.1} parent=23 // pred_fallthru
          _
        %s121 = sand.u32 %s26, 1
        %s122 = scalar_lea.sflag [#allocation3], %s121
        %s123 = sand.u32 %s26, 1
        %s124 = smul.addr %s123, 32
        %s125 = scalar_lea.vmem [#allocation2], %s124
        %p126 = pneg %p39
        %p127 = pneg %p36
        %p128 = pneg %p65
        %p129 = pneg %p62
        %s130 = sand.u32 %s52, 1
        %s131 = scalar_lea.sflag [#allocation4], %s130
        %s132 = sand.u32 %s52, 1
        %s133 = smul.addr %s132, 4
        %s134 = scalar_lea.vmem [#allocation5], %s133
        %s135 = smul.u32 2, %s18
        %s136 = smul.u32 2, %s18
        %v137 = vld [vmem:[%s116] sm:$0xff]
        %v138 = vld [vmem:[%s116 + $0x8] sm:$0xff]
        %v139 = vld [vmem:[%s116 + $0x10] sm:$0x1]
        %v140 = vld [vmem:[%s116 + $0x18] sm:$0x1]
        %vm141 = vcmask 1040384
        %v142 = vsel %vm141, %v139, 0.0
        %v143 = vadd.f32 %v137, %v142
        %v144 = vrot.slane %v143, 4
        %v145 = vadd.f32 %v143, %v144
        %v146 = vrot.slane %v145, 2
        %v147 = vadd.f32 %v145, %v146
        %v148 = vrot.slane %v147, 1
        %v149 = vadd.f32 %v147, %v148
        %v150 = vsel %vm141, %v140, 0.0
        %v151 = vadd.f32 %v138, %v150
        %v152 = vrot.slane %v151, 4
        %v153 = vadd.f32 %v151, %v152
        %v154 = vrot.slane %v153, 2
        %v155 = vadd.f32 %v153, %v154
        %v156 = vrot.slane %v155, 1
        %v157 = vadd.f32 %v155, %v156
        %v158 = vsub.f32 %v149, %v137
        %v159 = vsub.f32 %v157, %v138
        %v160 = vmul.f32 %v158, 0.125
        %v161 = vmul.f32 %v159, 0.125
        %v164 = vrot.slane %v160, 7
        %v165 = vrot.slane %v161, 7
        %v168 = vsel %vm141, %v137, %v164
        %v169 = vsel %vm141, %v138, %v165
        %v172 = vcombine.low %v168, %v169
        %v174 = vunpack.c.l.s4 1983009808
        %v175 = vunpack.c.0.s8 %v174
        %v176 = vlaneseq
        %v177 = vshrl.u32 %v176, 7
        %v178 = vsub.s32 %v175, %v177
        %v179 = vrot.slane %v172, %v178
        %181 = vst [vmem:[%s134] sm:$0xf] %v179
        %s182 = sand.u32 %s52, 1
        %s183 = scalar_lea.sflag [#allocation4], %s182
        %s184 = sand.u32 %s52, 1
        %s185 = smul.addr %s184, 4
        %s186 = scalar_lea.vmem [#allocation5], %s185
        // Predicated region
        $region29: #{tpu_custom_call.1} parent=23 // pred_check
          %p187 = pneg %p62
        $region30: #{tpu_custom_call.1} parent=23 // pred_check_branch
          %189 = sbr.rel (%p187) target = $region32
        $region31: #{tpu_custom_call.1} parent=23 // pred_region
          %s190 = smul.u32 2, %s18
          %s192 = ssub.s32 64, 64
          %193 = vsyncadd %s183, %s192
          %s194 = smul.addr %s190, 32
          %s195 = scalar_lea.hbm %s1, %s194
          %s197 = sshll.u32 %s186, 4
          %s198 = int_to_ptr.vmem [resolvable:$true] %s197
          %200 = dma.vmem_to_hbm [thread:$0]  %s198, 64, %s195, %s183
        $region32: #{tpu_custom_call.1} parent=23 // pred_fallthru
          _
      $region24: #{tpu_custom_call.1} parent=5 // pred_fallthru
        _
      %p201 = scmp.le.s32.totalorder 2, %s13
      // Predicated region
      $region33: #{tpu_custom_call.1} parent=5 // pred_check
        %p202 = pneg %p201
      $region34: #{tpu_custom_call.1} parent=5 // pred_check_branch
        %204 = sbr.rel (%p202) target = $region36
      $region35: #{tpu_custom_call.1} parent=5 // pred_region
        %s205 = ssub.s32 %s13, 2
        // Predicated region
        $region37: #{tpu_custom_call.1} parent=35 // pred_check
          %p206 = pneg %p68
        $region38: #{tpu_custom_call.1} parent=35 // pred_check_branch
          %208 = sbr.rel (%p206) target = $region40
        $region39: #{tpu_custom_call.1} parent=35 // pred_region
          %s209 = sand.u32 %s53, 1
          %s210 = scalar_lea.sflag [#allocation4], %s209
          %s211 = sand.u32 %s53, 1
          %s212 = smul.addr %s211, 4
          %s213 = scalar_lea.vmem [#allocation5], %s212
          %214 = dma.done %s210, 64
        $region40: #{tpu_custom_call.1} parent=35 // pred_fallthru
          _
      $region36: #{tpu_custom_call.1} parent=5 // pred_fallthru
        _
    $region6: #{tpu_custom_call.1} parent=1 // loop_footer
      %s17 = sadd.s32 1, %s13
    $region7: #{tpu_custom_call.1} parent=1 // loop_footer_branch
      %12 = sbr.rel target = $region3
    $region8: #{tpu_custom_call.1} parent=1 // loop_exit
      _
    %215 = vsyncpa [#allocation3], 1
    %s216 = scalar_lea.sflag [#allocation3], 1
    %217 = vsyncpa %s216, 1
    %218 = vsyncpa [#allocation4], 1
    %s219 = scalar_lea.sflag [#allocation4], 1
    %220 = vsyncpa %s219, 1

</llo_original>
